<compile_context>
chip_gen: v6e
topology: v6e:2x2x1
jax: 0.10.0
libtpu: 0.0.40
codegen_flags: <defaults>
</compile_context>

<pallas_src>
import math

import jax
import jax.numpy as jnp
from jax.experimental import pallas as pl
from jax.experimental.pallas import tpu as pltpu

VMEM_SPEC = pl.BlockSpec(memory_space=pltpu.MemorySpace.VMEM)


# ---------------------------------------------------------------------------
# Shared math helpers.
# ---------------------------------------------------------------------------
def _gelu_tanh(h):
    # TODO(synk): torch nn.GELU() default is erf-exact; tanh approximation used
    # here (max abs diff ~1e-3) pending guaranteed erf lowering in Mosaic.
    c = 0.7978845608028654  # sqrt(2/pi)
    return 0.5 * h * (1.0 + jnp.tanh(c * (h + 0.044715 * h * h * h)))


# ---------------------------------------------------------------------------
# One-time parameter packing (runs once, NOT per forward call).
# ---------------------------------------------------------------------------
def _round_up(x, m):
    return ((x + m - 1) // m) * m


def _pack_rows(entries, dtype, row_align):
    """Stack 2-D arrays along rows into one slab.

    Each block starts at a row multiple of `row_align`, columns are padded to
    the widest entry.  Returns (slab, layout) with layout[name] = (row0, nrows,
    ncols) — all static Python ints, used for static slicing inside kernels.
    """
    width = max(m.shape[1] for _, m in entries)
    blocks, layout, r0 = [], {}, 0
    for name, m in entries:
        nr, nc = m.shape
        nr_pad = _round_up(nr, row_align)
        blk = jnp.zeros((nr_pad, width), jnp.float32).at[:nr, :nc].set(
            m.astype(jnp.float32))
        blocks.append(blk)
        layout[name] = (r0, nr, nc)
        r0 += nr_pad
    return jnp.concatenate(blocks, axis=0).astype(dtype), layout


def _pad_gates(mat3h, H, P):
    """(rows, 3H) with gate blocks r|z|n -> (rows, 3P), each gate lane-aligned."""
    rows = mat3h.shape[0]
    out = jnp.zeros((rows, 3 * P), jnp.float32)
    for g in range(3):
        out = out.at[:, g * P:g * P + H].set(mat3h[:, g * H:(g + 1) * H])
    return out


def prepare_params(params, cfg):
    """Pack everything into per-path (weight-slab, bias-slab) pairs."""
    E, H, Ed = cfg["emotion_dim"], cfg["hidden_dim"], cfg["embedding_dim"]
    L, nh = cfg["n_layers"], cfg["n_heads"]
    dh = H // nh
    P = _round_up(H, 128)          # lane-aligned gate / KV block width
    scale = 1.0 / math.sqrt(dh)
    # nn.MultiheadAttention(embed_dim=hidden_dim) applied to the embedder
    # output requires embedding_dim == hidden_dim (as in the PyTorch module).
    assert Ed == H, "fused path requires embedding_dim == hidden_dim"

    # ---- emotion-embedder-only path (no memory context) ----
    ew_slab, ew_layout = _pack_rows(
        [("w1", params["emb_w1"].T), ("w2", params["emb_w2"].T)],
        jnp.bfloat16, 16)
    eb_slab, eb_layout = _pack_rows(
        [("b1", params["emb_b1"][None, :]), ("g", params["ln_g"][None, :]),
         ("beta", params["ln_b"][None, :]), ("b2", params["emb_b2"][None, :])],
        jnp.float32, 8)

    # ---- fused memory-context path ----
    w, b = params["mha"]["in_proj_w"], params["mha"]["in_proj_b"]
    wq_t = w[0:H].T                                               # (Ed, H)
    # Fold q-projection and 1/sqrt(dh) into the embedder's second Linear.
    w2q = (params["emb_w2"].T @ wq_t) * scale                     # (H, H)
    b2q = ((params["emb_b2"] @ wq_t + b[0:H]) * scale)[None, :]   # (1, H)
    # K/V fused, each block lane-aligned to P.
    wkv = jnp.zeros((H, 2 * P), jnp.float32)
    wkv = wkv.at[:, 0:H].set(w[H:2 * H].T).at[:, P:P + H].set(w[2 * H:3 * H].T)
    bkv = jnp.zeros((1, 2 * P), jnp.float32)
    bkv = bkv.at[0, 0:H].set(b[H:2 * H]).at[0, P:P + H].set(b[2 * H:3 * H])
    # Head-selection (block-diagonal indicator) matrices for per-head scores.
    head_ids = jnp.arange(H) // dh
    sel = (head_ids[:, None] == jnp.arange(nh)[None, :]).astype(jnp.float32)

    fw_entries = [("e_w1t", params["emb_w1"].T), ("w2q", w2q)]
    fb_entries = [("e_b1", params["emb_b1"][None, :]),
                  ("ln_g", params["ln_g"][None, :]),
                  ("ln_b", params["ln_b"][None, :]), ("b2q", b2q)]
    for l, layer in enumerate(params["gru"]):
        fw_entries += [(f"wi{l}", _pad_gates(layer["w_ih"].T, H, P)),
                       (f"wh{l}", _pad_gates(layer["w_hh"].T, H, P))]
        fb_entries += [(f"bi{l}", _pad_gates(layer["b_ih"][None, :], H, P)),
                       (f"bh{l}", _pad_gates(layer["b_hh"][None, :], H, P))]
    fw_entries += [("wkv", wkv), ("sel", sel), ("selT", sel.T),
                   ("wo", params["mha"]["out_proj_w"].T)]
    fb_entries += [("bkv", bkv), ("bo", params["mha"]["out_proj_b"][None, :])]

    fw_slab, fw_layout = _pack_rows(fw_entries, jnp.bfloat16, 16)
    fb_slab, fb_layout = _pack_rows(fb_entries, jnp.float32, 8)

    return dict(E=E, H=H, Ed=Ed, P=P, n_layers=L, n_heads=nh,
                ew_slab=ew_slab, ew_layout=ew_layout,
                eb_slab=eb_slab, eb_layout=eb_layout,
                fw_slab=fw_slab, fw_layout=fw_layout,
                fb_slab=fb_slab, fb_layout=fb_layout)


# ---------------------------------------------------------------------------
# Kernel 1: emotion embedder only (no-memory-context path). 3 input DMAs.
# ---------------------------------------------------------------------------
def make_embedder_kernel(prep):
    wl, bl = prep["ew_layout"], prep["eb_layout"]

    def kernel(x_ref, w_ref, b_ref, o_ref):
        def W(name):
            r0, nr, nc = wl[name]
            return w_ref[r0:r0 + nr, 0:nc]

        def B(name):
            r0, _, nc = bl[name]
            return b_ref[r0:r0 + 1, 0:nc]

        def mm(a, name):  # bf16 operands, f32 accumulation
            return jnp.dot(a.astype(jnp.bfloat16), W(name),
                           preferred_element_type=jnp.float32)

        h = mm(x_ref[...], "w1") + B("b1")
        mean = jnp.mean(h, axis=-1, keepdims=True)
        var = jnp.mean((h - mean) ** 2, axis=-1, keepdims=True)
        h = (h - mean) * jax.lax.rsqrt(var + 1e-5) * B("g") + B("beta")
        h = _gelu_tanh(h)
        o_ref[...] = mm(h, "w2") + B("b2")

    return kernel


def emotion_embedder_pallas(x, prep):
    """x: (1, emotion_dim) -> (1, embedding_dim)."""
    return pl.pallas_call(
        make_embedder_kernel(prep),
        out_shape=jax.ShapeDtypeStruct((1, prep["Ed"]), jnp.float32),
        in_specs=[VMEM_SPEC] * 3,
        out_specs=VMEM_SPEC,
    )(x, prep["ew_slab"], prep["eb_slab"])


# ---------------------------------------------------------------------------
# Kernel 2: fully fused memory-context path. 4 input DMAs, no VMEM scratch.
#   emotion embedder (with folded, pre-scaled q projection)
#   -> stacked GRU (wavefront across layers, unrolled over time,
#      lane-aligned gates, register-resident states)
#   -> MultiheadAttention with a length-1 query.
# ---------------------------------------------------------------------------
def make_fused_kernel(prep):
    H, P, L = prep["H"], prep["P"], prep["n_layers"]
    wl, bl = prep["fw_layout"], prep["fb_layout"]

    def kernel(emo_ref, ctx_ref, w_ref, b_ref, o_ref):
        def W(name):
            r0, nr, nc = wl[name]
            return w_ref[r0:r0 + nr, 0:nc]

        def B(name):
            r0, _, nc = bl[name]
            return b_ref[r0:r0 + 1, 0:nc]

        def mm(a, name):  # bf16 operands, f32 accumulation
            return jnp.dot(a.astype(jnp.bfloat16), W(name),
                           preferred_element_type=jnp.float32)

        # ---- emotion embedder: Linear -> LayerNorm -> GELU -> Linear ----
        # (q projection and 1/sqrt(dh) are pre-folded into "w2q"/"b2q").
        h = mm(emo_ref[...], "e_w1t") + B("e_b1")
        mean = jnp.mean(h, axis=-1, keepdims=True)
        var = jnp.mean((h - mean) ** 2, axis=-1, keepdims=True)
        h = (h - mean) * jax.lax.rsqrt(var + 1e-5) * B("ln_g") + B("ln_b")
        h = _gelu_tanh(h)
        q_scaled = mm(h, "w2q") + B("b2q")                         # (1, H)

        # ---- temporal_processor: stacked GRU (torch gate order r|z|n, h0=0) ----
        S = ctx_ref.shape[0]
        # Layer-0 input projections for ALL timesteps at once (non-recurrent).
        gi0 = mm(ctx_ref[...], "wi0") + B("bi0")                   # (S, 3P)
        h_state = [jnp.zeros((1, H), jnp.float32) for _ in range(L)]
        outs = []
        for t in range(S):                      # static unroll over time
            x_t = None
            for l in range(L):                  # wavefront across layers
                gi_t = gi0[t:t + 1, :] if l == 0 else mm(x_t, f"wi{l}") + B(f"bi{l}")
                gh = mm(h_state[l], f"wh{l}") + B(f"bh{l}")        # (1, 3P)
                r = jax.nn.sigmoid(gi_t[:, 0:H] + gh[:, 0:H])
                z = jax.nn.sigmoid(gi_t[:, P:P + H] + gh[:, P:P + H])
                n = jnp.tanh(gi_t[:, 2 * P:2 * P + H] + r * gh[:, 2 * P:2 * P + H])
                h_new = (1.0 - z) * n + z * h_state[l]
                h_state[l] = h_new
                x_t = h_new
            outs.append(h_state[L - 1])
        feats = jnp.concatenate(outs, axis=0)                      # (S, H)

        # ---- context_integration: MHA, query length 1, keys/values = feats ----
        kv = mm(feats, "wkv") + B("bkv")                           # (S, 2P)
        k = kv[:, 0:H]
        v = kv[:, P:P + H]
        # Per-head scores: full-width elementwise q*k, then a block-diagonal
        # selection matmul sums within each head.  q_scaled already carries
        # the 1/sqrt(dh) factor.
        scores = mm(q_scaled * k, "sel")                           # (S, nh)
        m = jnp.max(scores, axis=0, keepdims=True)
        p = jnp.exp(scores - m)
        p = p * pl.reciprocal(jnp.sum(p, axis=0, keepdims=True), approx=True)
        p_full = mm(p, "selT")                                     # (S, H)
        attn = jnp.sum(p_full * v, axis=0, keepdims=True)          # (1, H)
        o_ref[...] = mm(attn, "wo") + B("bo")

    return kernel


def fused_context_pallas(emo, ctx, prep):
    """emo: (1, emotion_dim), ctx: (S, embedding_dim) -> (1, hidden_dim)."""
    return pl.pallas_call(
        make_fused_kernel(prep),
        out_shape=jax.ShapeDtypeStruct((1, prep["H"]), jnp.float32),
        in_specs=[VMEM_SPEC] * 4,
        out_specs=VMEM_SPEC,
    )(emo, ctx, prep["fw_slab"], prep["fb_slab"])


# ---------------------------------------------------------------------------
# Parameter init (deterministic, synthetic, torch layout) + forward glue.
# ---------------------------------------------------------------------------
def init_params(key, cfg):
    E, H, Ed, L = cfg["emotion_dim"], cfg["hidden_dim"], cfg["embedding_dim"], cfg["n_layers"]
    ks = jax.random.split(key, 9)

    def rnd(k, shape, scale=0.1):
        return scale * jax.random.normal(k, shape, jnp.float32)

    params = {
        "emb_w1": rnd(ks[0], (H, E)),
        "emb_b1": rnd(ks[1], (H,)),
        "ln_g": jnp.ones((H,), jnp.float32),
        "ln_b": jnp.zeros((H,), jnp.float32),
        "emb_w2": rnd(ks[2], (Ed, H)),
        "emb_b2": rnd(ks[3], (Ed,)),
    }

    gru_keys = jax.random.split(ks[4], L * 4)
    gru = []
    in_dim = Ed
    for l in range(L):
        gru.append({
            "w_ih": rnd(gru_keys[4 * l + 0], (3 * H, in_dim)),
            "w_hh": rnd(gru_keys[4 * l + 1], (3 * H, H)),
            "b_ih": rnd(gru_keys[4 * l + 2], (3 * H,)),
            "b_hh": rnd(gru_keys[4 * l + 3], (3 * H,)),
        })
        in_dim = H
    params["gru"] = gru

    params["mha"] = {
        "in_proj_w": rnd(ks[5], (3 * H, H)),
        "in_proj_b": rnd(ks[6], (3 * H,)),
        "out_proj_w": rnd(ks[7], (H, H)),
        "out_proj_b": rnd(ks[8], (H,)),
    }
    return params


def emotional_context_forward(prep, emotional_state, memory_context=None):
    emotion_values = jnp.array(
        [emotional_state[k] for k in sorted(emotional_state.keys())],
        dtype=jnp.float32)[None, :]
    if memory_context is None:
        return emotion_embedder_pallas(emotion_values, prep)[0]
    return fused_context_pallas(emotion_values, memory_context, prep)[0]


# ---------------------------------------------------------------------------
# Pure-JAX f32 reference (mirrors the PyTorch module semantics).
# ---------------------------------------------------------------------------
def reference_forward(params, cfg, emotion_values, memory_context=None):
    x = emotion_values[None, :]
    h = x @ params["emb_w1"].T + params["emb_b1"]
    mean = jnp.mean(h, -1, keepdims=True)
    var = jnp.mean((h - mean) ** 2, -1, keepdims=True)
    h = (h - mean) / jnp.sqrt(var + 1e-5) * params["ln_g"] + params["ln_b"]
    h = _gelu_tanh(h)
    emb = h @ params["emb_w2"].T + params["emb_b2"]
    if memory_context is None:
        return emb[0]
    H, nh = cfg["hidden_dim"], cfg["n_heads"]
    dh = H // nh
    feats = memory_context
    for layer in params["gru"]:
        h_t = jnp.zeros((H,), jnp.float32)
        outs = []
        for t in range(feats.shape[0]):
            gi = layer["w_ih"] @ feats[t] + layer["b_ih"]
            gh = layer["w_hh"] @ h_t + layer["b_hh"]
            r = jax.nn.sigmoid(gi[0:H] + gh[0:H])
            z = jax.nn.sigmoid(gi[H:2 * H] + gh[H:2 * H])
            c = jnp.tanh(gi[2 * H:] + r * gh[2 * H:])
            h_t = (1.0 - z) * c + z * h_t
            outs.append(h_t)
        feats = jnp.stack(outs, axis=0)
    w, b = params["mha"]["in_proj_w"], params["mha"]["in_proj_b"]
    q = emb @ w[0:H].T + b[0:H]
    k = feats @ w[H:2 * H].T + b[H:2 * H]
    v = feats @ w[2 * H:].T + b[2 * H:]
    qh = q.reshape(nh, dh)
    kh = k.reshape(-1, nh, dh)
    vh = v.reshape(-1, nh, dh)
    scores = jnp.einsum("hd,khd->hk", qh, kh) / math.sqrt(dh)
    p = jax.nn.softmax(scores, axis=-1)
    attn = jnp.einsum("hk,khd->hd", p, vh).reshape(1, H)
    out = attn @ params["mha"]["out_proj_w"].T + params["mha"]["out_proj_b"]
    return out[0]


if __name__ == "__main__":
    cfg = dict(emotion_dim=8, hidden_dim=32, embedding_dim=32, n_layers=2, n_heads=4)
    seq_len = 8

    key = jax.random.PRNGKey(0)
    pkey, skey, ckey = jax.random.split(key, 3)
    params = init_params(pkey, cfg)
    prep = prepare_params(params, cfg)          # one-time packing, NOT per call

    emotion_names = ["anger", "anticipation", "disgust", "fear",
                     "joy", "sadness", "surprise", "trust"]
    vals = jax.random.uniform(skey, (cfg["emotion_dim"],), jnp.float32)
    emotional_state = {name: float(vals[i]) for i, name in enumerate(emotion_names)}

    memory_context = 0.1 * jax.random.normal(
        ckey, (seq_len, cfg["embedding_dim"]), jnp.float32)

    out_no_ctx = emotional_context_forward(prep, emotional_state, None)
    out_ctx = emotional_context_forward(prep, emotional_state, memory_context)
    jax.block_until_ready((out_no_ctx, out_ctx))

    assert out_no_ctx.shape == (cfg["embedding_dim"],)
    assert out_ctx.shape == (cfg["hidden_dim"],)
    assert bool(jnp.all(jnp.isfinite(out_no_ctx))) and bool(jnp.all(jnp.isfinite(out_ctx)))

    # Correctness vs a plain-JAX f32 reference (loose tol: bf16 matmul operands
    # + approx softmax reciprocal).
    ref_no_ctx = reference_forward(params, cfg, vals, None)
    ref_ctx = reference_forward(params, cfg, vals, memory_context)
    assert float(jnp.max(jnp.abs(out_no_ctx - ref_no_ctx))) < 3e-2
    assert float(jnp.max(jnp.abs(out_ctx - ref_ctx))) < 3e-2

    print("KERNEL_OK")
</pallas_src>

<mosaic_0001>
module attributes {stable_mosaic.version = 11 : i64} {
  func.func @kernel(%arg0: memref<1x8xf32, #tpu.memory_space<vmem>>, %arg1: memref<48x32xbf16, #tpu.memory_space<vmem>>, %arg2: memref<32x32xf32, #tpu.memory_space<vmem>>, %arg3: memref<1x32xf32, #tpu.memory_space<vmem>>) attributes {dimension_semantics = [], scalar_prefetch = 0 : i64, scratch_operands = 0 : i64, tpu.core_type = #tpu.core_type<tc>} {
    %c0 = arith.constant 0 : index
    %c0_0 = arith.constant 0 : index
    %0 = vector.load %arg0[%c0, %c0_0] : memref<1x8xf32, #tpu.memory_space<vmem>>, vector<1x8xf32>
    %1 = arith.truncf %0 : vector<1x8xf32> to vector<1x8xbf16>
    %c0_1 = arith.constant 0 : index
    %c0_2 = arith.constant 0 : index
    %2 = vector.load %arg1[%c0_1, %c0_2] : memref<48x32xbf16, #tpu.memory_space<vmem>>, vector<8x32xbf16>
    %cst = arith.constant dense<0.000000e+00> : vector<1x32xf32>
    %3 = tpu.matmul %1, %2, %cst {dimension_numbers = #tpu.dot_dimension_numbers<[1], [0], [0], [1], [0, 0, 1, 1], [], []>} : vector<1x8xbf16>, vector<8x32xbf16>, vector<1x32xf32> -> vector<1x32xf32>
    %c0_3 = arith.constant 0 : index
    %c0_4 = arith.constant 0 : index
    %4 = vector.load %arg2[%c0_3, %c0_4] : memref<32x32xf32, #tpu.memory_space<vmem>>, vector<1x32xf32>
    %5 = arith.addf %3, %4 : vector<1x32xf32>
    %cst_5 = arith.constant dense<0.000000e+00> : vector<1xf32>
    %6 = vector.multi_reduction <add>, %5, %cst_5 [1] : vector<1x32xf32> to vector<1xf32>
    %7 = vector.shape_cast %6 : vector<1xf32> to vector<1x1xf32>
    %cst_6 = arith.constant 3.200000e+01 : f32
    %8 = vector.broadcast %cst_6 : f32 to vector<1x1xf32>
    %9 = arith.divf %7, %8 : vector<1x1xf32>
    %10 = vector.broadcast %9 : vector<1x1xf32> to vector<1x32xf32>
    %11 = arith.subf %5, %10 : vector<1x32xf32>
    %12 = arith.mulf %11, %11 : vector<1x32xf32>
    %cst_7 = arith.constant dense<0.000000e+00> : vector<1xf32>
    %13 = vector.multi_reduction <add>, %12, %cst_7 [1] : vector<1x32xf32> to vector<1xf32>
    %14 = vector.shape_cast %13 : vector<1xf32> to vector<1x1xf32>
    %cst_8 = arith.constant 3.200000e+01 : f32
    %15 = vector.broadcast %cst_8 : f32 to vector<1x1xf32>
    %16 = arith.divf %14, %15 : vector<1x1xf32>
    %17 = vector.broadcast %9 : vector<1x1xf32> to vector<1x32xf32>
    %18 = arith.subf %5, %17 : vector<1x32xf32>
    %cst_9 = arith.constant 9.99999974E-6 : f32
    %19 = vector.broadcast %cst_9 : f32 to vector<1x1xf32>
    %20 = arith.addf %16, %19 : vector<1x1xf32>
    %21 = math.rsqrt %20 : vector<1x1xf32>
    %22 = vector.broadcast %21 : vector<1x1xf32> to vector<1x32xf32>
    %23 = arith.mulf %18, %22 : vector<1x32xf32>
    %c8 = arith.constant 8 : index
    %c0_10 = arith.constant 0 : index
    %24 = vector.load %arg2[%c8, %c0_10] : memref<32x32xf32, #tpu.memory_space<vmem>>, vector<1x32xf32>
    %25 = arith.mulf %23, %24 : vector<1x32xf32>
    %c16 = arith.constant 16 : index
    %c0_11 = arith.constant 0 : index
    %26 = vector.load %arg2[%c16, %c0_11] : memref<32x32xf32, #tpu.memory_space<vmem>>, vector<1x32xf32>
    %27 = arith.addf %25, %26 : vector<1x32xf32>
    %cst_12 = arith.constant 5.000000e-01 : f32
    %28 = vector.broadcast %cst_12 : f32 to vector<1x32xf32>
    %29 = arith.mulf %28, %27 : vector<1x32xf32>
    %cst_13 = arith.constant 4.471500e-02 : f32
    %30 = vector.broadcast %cst_13 : f32 to vector<1x32xf32>
    %31 = arith.mulf %30, %27 : vector<1x32xf32>
    %32 = arith.mulf %31, %27 : vector<1x32xf32>
    %33 = arith.mulf %32, %27 : vector<1x32xf32>
    %34 = arith.addf %27, %33 : vector<1x32xf32>
    %cst_14 = arith.constant 0.797884583 : f32
    %35 = vector.broadcast %cst_14 : f32 to vector<1x32xf32>
    %36 = arith.mulf %35, %34 : vector<1x32xf32>
    %37 = math.tanh %36 : vector<1x32xf32>
    %cst_15 = arith.constant 1.000000e+00 : f32
    %38 = vector.broadcast %cst_15 : f32 to vector<1x32xf32>
    %39 = arith.addf %38, %37 : vector<1x32xf32>
    %40 = arith.mulf %29, %39 : vector<1x32xf32>
    %41 = arith.truncf %40 : vector<1x32xf32> to vector<1x32xbf16>
    %c16_16 = arith.constant 16 : index
    %c0_17 = arith.constant 0 : index
    %42 = vector.load %arg1[%c16_16, %c0_17] : memref<48x32xbf16, #tpu.memory_space<vmem>>, vector<32x32xbf16>
    %cst_18 = arith.constant dense<0.000000e+00> : vector<1x32xf32>
    %43 = tpu.matmul %41, %42, %cst_18 {dimension_numbers = #tpu.dot_dimension_numbers<[1], [0], [0], [1], [0, 0, 1, 1], [], []>} : vector<1x32xbf16>, vector<32x32xbf16>, vector<1x32xf32> -> vector<1x32xf32>
    %c24 = arith.constant 24 : index
    %c0_19 = arith.constant 0 : index
    %44 = vector.load %arg2[%c24, %c0_19] : memref<32x32xf32, #tpu.memory_space<vmem>>, vector<1x32xf32>
    %45 = arith.addf %43, %44 : vector<1x32xf32>
    %c0_20 = arith.constant 0 : index
    %c0_21 = arith.constant 0 : index
    %46 = vector.load %arg3[%c0_20, %c0_21] : memref<1x32xf32, #tpu.memory_space<vmem>>, vector<1x32xf32>
    tpu.vector_store %arg3[%c0_20, %c0_21], %45 {strides = array<i32>} : memref<1x32xf32, #tpu.memory_space<vmem>>, vector<1x32xf32>,
    return
  }
}

</mosaic_0001>

<llo_original>
// kernel: tpu_custom_call.1
$region0: #{tpu_custom_call.1}
  #allocation0 [shape = 'u32[]', space=smem, size = 0x4, offset = 0x4, fixed_abs, tag = 'smem constant byte address 0x4 - core index']
  #allocation1 [shape = 'u32[144,128]{1,0:T(1,128)}', space=vmem, size = 0x12000, scoped, tag = 'internal scratch']
  %s0 = inlined_call_operand.vmem [shape: f32[1,8], index: 0, kind: input, shape index: {}]
  %s1 = inlined_call_operand.vmem [shape: bf16[48,32], index: 1, kind: input, shape index: {}]
  %s2 = inlined_call_operand.vmem [shape: f32[32,32], index: 2, kind: input, shape index: {}]
  %s3 = inlined_call_operand.hbm [shape: f32[1,32], index: 3, kind: output, shape index: {}]
  %s4 = sld [smem:[#allocation0]]
  $region22: #{tpu_custom_call.1} parent=0
    _
  %s6 = ssub.s32 1, %s4
  %s7 = scalar_select 0, %s6, %s4
  $region1: #{tpu_custom_call.1} parent=0
    #allocation2 [shape = 'u8[512]{0}', space=vmem, size = 0x400, scoped, tag = 'output window, operand 0, single buffered']
    #allocation3 [shape = 's32[1]{0}', space=sflag, size = 0x4, scoped, tag = 'scoped memory for tpu_custom_call.1']
    %8 = vsyncpa [#allocation3], 0
    // Predicated region
    $region2: #{tpu_custom_call.1} parent=1 // pred_check
      _
    $region3: #{tpu_custom_call.1} parent=1 // pred_check_branch
      %10 = sbr.rel (0) target = $region5
    $region4: #{tpu_custom_call.1} parent=1 // pred_region
      _
    $region5: #{tpu_custom_call.1} parent=1 // pred_fallthru
      _
    // Predicated region
    $region6: #{tpu_custom_call.1} parent=1 // pred_check
      _
    $region7: #{tpu_custom_call.1} parent=1 // pred_check_branch
      %12 = sbr.rel (0) target = $region9
    $region8: #{tpu_custom_call.1} parent=1 // pred_region
      _
    $region9: #{tpu_custom_call.1} parent=1 // pred_fallthru
      _
    // Predicated region
    $region10: #{tpu_custom_call.1} parent=1 // pred_check
      _
    $region11: #{tpu_custom_call.1} parent=1 // pred_check_branch
      %14 = sbr.rel (0) target = $region13
    $region12: #{tpu_custom_call.1} parent=1 // pred_region
      _
    $region13: #{tpu_custom_call.1} parent=1 // pred_fallthru
      _
    %v16 = vld [vmem:[%s0] sm:$0x1]
    %v17 = vpack.c.bf16 %v16, %v16
    %v18 = vld [vmem:[%s1] sm:$0xf]
    %v19 = vld [vmem:[%s2] sm:$0x1]
    %vm20 = vcmask 64512
    %v22 = vsel %vm20, %v17, 0
    %vm24 = vcmask 1043456
    %v26 = vsel %vm24, %v18, 0
    %28 = vmatprep.subr.bf16.mxu0 0
    %29 = vmatpush1.bf16.msra.mxu0 0
    %30 = vmatprep.subr.bf16.mxu0 0
    %31 = vmatpush1.bf16.msra.mxu0 0
    %32 = vmatprep.subr.bf16.mxu0 0
    %33 = vmatpush1.bf16.msra.mxu0 0
    %34 = vmatprep.subr.bf16.mxu0 0
    %35 = vmatpush1.bf16.msra.mxu0 0
    %36 = vmatprep.subr.bf16.mxu0 0
    %37 = vmatpush1.bf16.msra.mxu0 0
    %38 = vmatprep.subr.bf16.mxu0 0
    %39 = vmatpush1.bf16.msra.mxu0 0
    %40 = vmatprep.subr.bf16.mxu0 0
    %41 = vmatpush1.bf16.msra.mxu0 0
    %42 = vmatprep.subr.bf16.mxu0 0
    %43 = vmatpush1.bf16.msra.mxu0 %v26
    %44 = vmatprep.subr.bf16.mxu0 0
    %45 = vmatpush2.bf16.msra.mxu0 0
    %46 = vmatprep.subr.bf16.mxu0 0
    %47 = vmatpush2.bf16.msra.mxu0 0
    %48 = vmatprep.subr.bf16.mxu0 0
    %49 = vmatpush2.bf16.msra.mxu0 0
    %50 = vmatprep.subr.bf16.mxu0 0
    %51 = vmatpush2.bf16.msra.mxu0 0
    %52 = vmatprep.subr.bf16.mxu0 0
    %53 = vmatpush2.bf16.msra.mxu0 0
    %54 = vmatprep.subr.bf16.mxu0 0
    %55 = vmatpush2.bf16.msra.mxu0 0
    %56 = vmatprep.subr.bf16.mxu0 0
    %57 = vmatpush2.bf16.msra.mxu0 0
    %58 = vmatprep.subr.bf16.mxu0 0
    %59 = vmatpush2.bf16.msra.mxu0 0
    %60 = vmatprep.mubr.bf16.mxu0 0
    %61 = vmatmul.mubr.bf16.gmra.mxu0 %v22
    %v62 = vpop.f32.mrf.mxu0
    %v63 = vadd.f32 %v19, %v62
    %v64 = vpop.f32.mrf.mxu0
    %v65 = vpop.f32.mrf.mxu0
    %v66 = vpop.f32.mrf.mxu0
    %67 = vdwg.mxu0
    %vm68 = vcmask 253952
    %v69 = vsel %vm68, %v63, 0.0
    %70 = vadd.xlane.f32.xlu0 %v69
    %v71 = vpop.xlane.xlu0 %70
    %v72 = vrcp.pop 32.0
    %v73 = vmul.f32 %v71, %v72
    %v74 = vsub.f32 %v63, %v73
    %v75 = vmul.f32 %v74, %v74
    %v76 = vsel %vm68, %v75, 0.0
    %77 = vadd.xlane.f32.xlu0 %v76
    %v78 = vpop.xlane.xlu0 %77
    %v79 = vmul.f32 %v78, %v72
    %v80 = vadd.f32 %v79, 1e-05
    %v81 = vrsqrt.pop %v80
    %v82 = vmul.f32 %v74, %v81
    %v83 = vld [vmem:[%s2 + $0x8] sm:$0x1]
    %v84 = vmul.f32 %v82, %v83
    %v85 = vld [vmem:[%s2 + $0x10] sm:$0x1]
    %v86 = vadd.f32 %v84, %v85
    %v87 = vmul.f32 %v86, 0.5
    %v88 = vmul.f32 %v86, 0.044715
    %v89 = vmul.f32 %v88, %v86
    %v90 = vmul.f32 %v89, %v86
    %v91 = vadd.f32 %v86, %v90
    %v92 = vmul.f32 %v91, 0.7978846
    %v93 = vtanh.pop %v92
    %v94 = vadd.f32 %v93, 1.0
    %v95 = vmul.f32 %v87, %v94
    %v96 = vpack.c.bf16 %v95, %v95
    %v97 = vld [vmem:[%s1 + $0x8] sm:$0xf]
    %v98 = vld [vmem:[%s1 + $0xc] sm:$0xf]
    %v99 = vld [vmem:[%s1 + $0x10] sm:$0xf]
    %v100 = vld [vmem:[%s1 + $0x14] sm:$0xf]
    %v101 = vld [vmem:[%s2 + $0x18] sm:$0x1]
    %v106 = vunpack.c.l.b16 %v97
    %v107 = vunpack.c.l.b16 %v98
    %v108 = vunpack.c.l.b16 %v99
    %v109 = vunpack.c.l.b16 %v100
    %v110 = vpack.c.b16 %v107, %v106
    %v111 = vpack.c.b16 %v109, %v108
    %vm114 = vcmask 261120
    %v116 = vsel %vm114, %v96, 0
    %118 = vmatprep.subr.bf16.mxu0 0
    %119 = vmatpush1.bf16.msra.mxu0 0
    %120 = vmatprep.subr.bf16.mxu0 0
    %121 = vmatpush1.bf16.msra.mxu0 0
    %122 = vmatprep.subr.bf16.mxu0 0
    %123 = vmatpush1.bf16.msra.mxu0 0
    %124 = vmatprep.subr.bf16.mxu0 0
    %125 = vmatpush1.bf16.msra.mxu0 0
    %126 = vmatprep.subr.bf16.mxu0 0
    %127 = vmatpush1.bf16.msra.mxu0 0
    %128 = vmatprep.subr.bf16.mxu0 0
    %129 = vmatpush1.bf16.msra.mxu0 0
    %130 = vmatprep.subr.bf16.mxu0 0
    %131 = vmatpush1.bf16.msra.mxu0 %v111
    %132 = vmatprep.subr.bf16.mxu0 0
    %133 = vmatpush1.bf16.msra.mxu0 %v110
    %134 = vmatprep.subr.bf16.mxu0 0
    %135 = vmatpush2.bf16.msra.mxu0 0
    %136 = vmatprep.subr.bf16.mxu0 0
    %137 = vmatpush2.bf16.msra.mxu0 0
    %138 = vmatprep.subr.bf16.mxu0 0
    %139 = vmatpush2.bf16.msra.mxu0 0
    %140 = vmatprep.subr.bf16.mxu0 0
    %141 = vmatpush2.bf16.msra.mxu0 0
    %142 = vmatprep.subr.bf16.mxu0 0
    %143 = vmatpush2.bf16.msra.mxu0 0
    %144 = vmatprep.subr.bf16.mxu0 0
    %145 = vmatpush2.bf16.msra.mxu0 0
    %146 = vmatprep.subr.bf16.mxu0 0
    %147 = vmatpush2.bf16.msra.mxu0 0
    %148 = vmatprep.subr.bf16.mxu0 0
    %149 = vmatpush2.bf16.msra.mxu0 0
    %150 = vmatprep.mubr.bf16.mxu0 0
    %151 = vmatmul.mubr.bf16.gmra.mxu0 %v116
    %v152 = vpop.f32.mrf.mxu0
    %v153 = vadd.f32 %v101, %v152
    %v154 = vpop.f32.mrf.mxu0
    %v155 = vpop.f32.mrf.mxu0
    %v156 = vpop.f32.mrf.mxu0
    %157 = vdwg.mxu0
    %158 = vst.msk [vmem:[#allocation2] sm:$0x1] %vm68, %v153
    // Predicated region
    $region14: #{tpu_custom_call.1} parent=1 // pred_check
      _
    $region15: #{tpu_custom_call.1} parent=1 // pred_check_branch
      %160 = sbr.rel (0) target = $region17
    $region16: #{tpu_custom_call.1} parent=1 // pred_region
      %s162 = ssub.s32 16, 16
      %163 = vsyncadd [#allocation3], %s162
      %s165 = sshll.u32 [#allocation2], 4
      %s166 = int_to_ptr.vmem [resolvable:$true] %s165
      %168 = dma.vmem_to_hbm [thread:$0]  %s166, 16, %s3, [#allocation3]
    $region17: #{tpu_custom_call.1} parent=1 // pred_fallthru
      _
    // Predicated region
    $region18: #{tpu_custom_call.1} parent=1 // pred_check
      _
    $region19: #{tpu_custom_call.1} parent=1 // pred_check_branch
      %170 = sbr.rel (0) target = $region21
    $region20: #{tpu_custom_call.1} parent=1 // pred_region
      %171 = dma.done [#allocation3], 16
    $region21: #{tpu_custom_call.1} parent=1 // pred_fallthru
      _
    %172 = vsyncpa [#allocation3], 1

</llo_original>
